<compile_context>
chip_gen: v6e
topology: v6e:2x2x1
jax: 0.10.0
libtpu: 0.0.40
codegen_flags: <defaults>
</compile_context>

<pallas_src>
import math

import jax
import jax.numpy as jnp
from jax.experimental import pallas as pl
from jax.experimental.pallas import tpu as pltpu


def _round_up(x, m):
    return ((x + m - 1) // m) * m


def _vmem_budgets():
    """(tile-sizing budget, vmem_limit_bytes) with headroom for Mosaic scratch.

    Falls back to the v7x per-TensorCore physical VMEM (64 MiB) when the
    hardware query is unavailable -- safe on every generation and still well
    above the 16/32 MiB default scoped limits on v5e/v6e.
    """
    phys = 64 * 1024 * 1024
    try:
        cap = getattr(pltpu.get_tpu_info(), "vmem_capacity_bytes", None)
        if cap:
            phys = int(cap)
    except Exception:
        pass
    return int(phys * 0.70), int(phys * 0.80)


def _select_tiles(m, d, f, itemsize, budget):
    """Pick (row tile tm, max F-chunk tf_cap, sublane min) that fit `budget`.

    Weight traffic per row tile is fixed (2*D*tf*itemsize per k step), so
    arithmetic intensity grows with tm.  Target a large tm for narrow dtypes,
    give remaining VMEM to the F chunk (fewer accumulator RMW passes / grid
    steps), shrinking tm only if the F chunk would drop below 512 lanes.
    """
    min_rows = {4: 8, 2: 16, 1: 32}.get(itemsize, 8)
    m_cap = _round_up(m, min_rows)
    tm = min(_round_up(1024 if itemsize <= 2 else 512, min_rows), m_cap)
    f_cap = _round_up(f, 128)
    per_tf = 4 * d * itemsize + 4 * itemsize          # W1 + W2 (x2 buffers) + b1
    while True:
        # x (single-buffered) + out (double-buffered) + f32 accumulator + b2.
        fixed = tm * d * (3 * itemsize + 4) + 2 * d * itemsize
        tf_cap = (budget - fixed) // per_tf // 128 * 128
        tf_cap = min(max(tf_cap, 0), f_cap)
        if tf_cap >= min(512, f_cap) or tm <= min_rows:
            return tm, max(tf_cap, 128), min_rows
        tm = max(min_rows, _round_up(tm // 2, min_rows))


def _pick_tf(f, tf_cap):
    """Largest lane-aligned F chunk <= tf_cap.  Prefer an exact divisor of F;
    otherwise zero-pad F up to a multiple of the chunk (exact: padded hidden
    units have zero weights and bias -> relu(0) = 0 -> contribute nothing)."""
    if f <= tf_cap:
        return f, f                                   # single chunk, no padding
    t = (tf_cap // 128) * 128
    while t >= 128:
        if f % t == 0:
            return t, f
        t -= 128
    n = -(-f // tf_cap)                               # number of chunks
    tf = _round_up(-(-f // n), 128)
    return tf, tf * n


def _block_spec(shape, index_map, *, single_buffered=False):
    """BlockSpec; k-invariant blocks get buffer_count=1 (double-buffering them
    is pure VMEM waste -- they are only re-DMA'd when the row tile changes)."""
    if single_buffered:
        try:
            return pl.BlockSpec(shape, index_map, pipeline_mode=pl.Buffered(1))
        except Exception:  # older jax without pipeline_mode / Buffered
            pass
    return pl.BlockSpec(shape, index_map)


def ffn_kernel(x_ref, w1_ref, b1_ref, w2_ref, b2_ref, o_ref, acc_ref):
    # x_ref: (tm, D)   w1_ref: (D, tf)   b1_ref: (1, tf)
    # w2_ref: (tf, D)  b2_ref: (1, D)    o_ref: (tm, D)   acc_ref: (tm, D) f32
    k = pl.program_id(1)

    # First matmul in the native I/O dtype, f32 accumulation on the MXU.
    h = jnp.dot(x_ref[...], w1_ref[...], preferred_element_type=jnp.float32)
    h = jnp.maximum(h + b1_ref[...].astype(jnp.float32), 0.0)   # bias + ReLU (VPU)
    # Second matmul: cast activations back to the I/O dtype for full MXU rate.
    part = jnp.dot(h.astype(x_ref.dtype), w2_ref[...],
                   preferred_element_type=jnp.float32)

    @pl.when(k == 0)
    def _first():                 # direct write: no zero-init + RMW pass
        acc_ref[...] = part

    @pl.when(k != 0)
    def _rest():
        acc_ref[...] += part

    @pl.when(k == pl.num_programs(1) - 1)
    def _finalize():
        o_ref[...] = (acc_ref[...] + b2_ref[...].astype(jnp.float32)).astype(o_ref.dtype)


def feed_forward(x, w1, b1, w2, b2, *, tm=None, tf=None):
    """x: (..., embed_dim) -> (..., embed_dim).  Weights: w1 (D, F), w2 (F, D)."""
    orig_shape = x.shape
    d = int(orig_shape[-1])
    f = int(w1.shape[1])
    m = int(math.prod(orig_shape[:-1]))
    itemsize = jnp.dtype(x.dtype).itemsize

    budget, vmem_limit = _vmem_budgets()
    auto_tm, tf_cap, min_rows = _select_tiles(m, d, f, itemsize, budget)

    if tm is None:
        tm = auto_tm
    else:
        tm = max(min_rows, min(_round_up(tm, min_rows), _round_up(m, min_rows)))
    if tf is not None and tf < f:
        tf_cap = max(128, min(tf_cap, (tf // 128) * 128))
    tf, f_pad = _pick_tf(f, tf_cap)

    # Zero-pad the hidden dim of the weights if the chunk doesn't divide F
    # (exact; never materializes the full W1/W2 in VMEM).
    if f_pad != f:
        w1 = jnp.pad(w1, ((0, 0), (0, f_pad - f)))
        b1 = jnp.pad(b1.reshape(-1), (0, f_pad - f))
        w2 = jnp.pad(w2, ((0, f_pad - f), (0, 0)))

    x2 = x.reshape(m, d)
    b1_2 = b1.reshape(1, f_pad)
    b2_2 = b2.reshape(1, d)

    grid = (pl.cdiv(m, tm), f_pad // tf)   # rows (parallel), F chunks (reduction)

    cost = pl.CostEstimate(
        flops=4 * m * d * f,
        transcendentals=0,
        bytes_accessed=int(itemsize) * (2 * m * d + 2 * d * f + f + d),
    )

    out = pl.pallas_call(
        ffn_kernel,
        out_shape=jax.ShapeDtypeStruct((m, d), x.dtype),
        grid_spec=pltpu.PrefetchScalarGridSpec(
            num_scalar_prefetch=0,
            grid=grid,
            in_specs=[
                _block_spec((tm, d), lambda i, k: (i, 0), single_buffered=True),  # x rows
                _block_spec((d, tf), lambda i, k: (0, k)),                        # W1 chunk
                _block_spec((1, tf), lambda i, k: (0, k)),                        # b1 chunk
                _block_spec((tf, d), lambda i, k: (k, 0)),                        # W2 chunk
                _block_spec((1, d), lambda i, k: (0, 0), single_buffered=True),   # b2
            ],
            out_specs=pl.BlockSpec((tm, d), lambda i, k: (i, 0)),
            scratch_shapes=[pltpu.VMEM((tm, d), jnp.float32)],  # f32 accumulator
        ),
        compiler_params=pltpu.CompilerParams(
            dimension_semantics=("parallel", "arbitrary"),
            vmem_limit_bytes=vmem_limit,
        ),
        cost_estimate=cost,
    )(x2, w1, b1_2, w2, b2_2)

    return out.reshape(orig_shape)


def feed_forward_ref(x, w1, b1, w2, b2):
    h = jnp.maximum(jnp.einsum("...d,df->...f", x, w1) + b1, 0.0)
    return jnp.einsum("...f,fd->...d", h, w2) + b2


if __name__ == "__main__":
    # Small shapes consistent with the module: (batch, seq, embed_dim)
    batch, seq, embed_dim, ff_dim = 2, 8, 32, 64

    key = jax.random.PRNGKey(0)
    kx, k1, kb1, k2, kb2 = jax.random.split(key, 5)

    x = jax.random.normal(kx, (batch, seq, embed_dim), dtype=jnp.float32)
    # Deterministic init mimicking nn.Linear's uniform(-1/sqrt(fan_in), 1/sqrt(fan_in))
    lim1 = 1.0 / jnp.sqrt(embed_dim)
    lim2 = 1.0 / jnp.sqrt(ff_dim)
    w1 = jax.random.uniform(k1, (embed_dim, ff_dim), jnp.float32, -lim1, lim1)
    b1 = jax.random.uniform(kb1, (ff_dim,), jnp.float32, -lim1, lim1)
    w2 = jax.random.uniform(k2, (ff_dim, embed_dim), jnp.float32, -lim2, lim2)
    b2 = jax.random.uniform(kb2, (embed_dim,), jnp.float32, -lim2, lim2)

    out = jax.block_until_ready(feed_forward(x, w1, b1, w2, b2))
    ref = feed_forward_ref(x, w1, b1, w2, b2)
    assert out.shape == (batch, seq, embed_dim)
    assert jnp.allclose(out, ref, atol=1e-5, rtol=1e-5)

    # Rows not a multiple of the sublane tile -> masked partial row block
    # (no jnp.pad / output slice anymore).
    x_odd = jax.random.normal(kx, (3, 5, embed_dim), dtype=jnp.float32)
    out_odd = jax.block_until_ready(feed_forward(x_odd, w1, b1, w2, b2))
    assert jnp.allclose(out_odd, feed_forward_ref(x_odd, w1, b1, w2, b2),
                        atol=1e-5, rtol=1e-5)

    # Multi-chunk F reduction (exercises the k>0 accumulation branch).
    d2, f2 = 128, 512
    kx2, k3, kb3, k4, kb4 = jax.random.split(jax.random.PRNGKey(0), 5)
    x_big = jax.random.normal(kx2, (batch, seq, d2), dtype=jnp.float32)
    w1b = jax.random.uniform(k3, (d2, f2), jnp.float32, -0.05, 0.05)
    b1b = jax.random.uniform(kb3, (f2,), jnp.float32, -0.05, 0.05)
    w2b = jax.random.uniform(k4, (f2, d2), jnp.float32, -0.05, 0.05)
    b2b = jax.random.uniform(kb4, (d2,), jnp.float32, -0.05, 0.05)
    out_big = jax.block_until_ready(feed_forward(x_big, w1b, b1b, w2b, b2b, tf=128))
    assert jnp.allclose(out_big, feed_forward_ref(x_big, w1b, b1b, w2b, b2b),
                        atol=1e-4, rtol=1e-4)

    # bf16 I/O smoke test (native-dtype MXU matmuls, f32 accumulation).
    outb = jax.block_until_ready(
        feed_forward(x.astype(jnp.bfloat16), w1.astype(jnp.bfloat16),
                     b1.astype(jnp.bfloat16), w2.astype(jnp.bfloat16),
                     b2.astype(jnp.bfloat16)))
    assert jnp.allclose(outb.astype(jnp.float32), ref, atol=5e-2, rtol=5e-2)

    print("KERNEL_OK")
</pallas_src>

<mosaic_0001>
module attributes {stable_mosaic.version = 11 : i64} {
  func.func @ffn_kernel(%arg0: i32, %arg1: i32, %arg2: memref<16x32xf32, #tpu.memory_space<vmem>>, %arg3: memref<32x64xf32, #tpu.memory_space<vmem>>, %arg4: memref<1x64xf32, #tpu.memory_space<vmem>>, %arg5: memref<64x32xf32, #tpu.memory_space<vmem>>, %arg6: memref<1x32xf32, #tpu.memory_space<vmem>>, %arg7: memref<16x32xf32, #tpu.memory_space<vmem>>, %arg8: memref<16x32xf32, #tpu.memory_space<vmem>>) attributes {dimension_semantics = [#tpu.dimension_semantics<parallel>, #tpu.dimension_semantics<arbitrary>], iteration_bounds = array<i64: 1, 1>, scalar_prefetch = 0 : i64, scratch_operands = 1 : i64, tpu.core_type = #tpu.core_type<tc>, window_params = [{pipeline_mode = #tpu.pipeline_mode<synchronous>, transform_indices = @transform_0, window_bounds = array<i64: 16, 32>}, {transform_indices = @transform_1, window_bounds = array<i64: 32, 64>}, {transform_indices = @transform_2, window_bounds = array<i64: 1, 64>}, {transform_indices = @transform_3, window_bounds = array<i64: 64, 32>}, {pipeline_mode = #tpu.pipeline_mode<synchronous>, transform_indices = @transform_4, window_bounds = array<i64: 1, 32>}, {transform_indices = @transform_5, window_bounds = array<i64: 16, 32>}]} {
    %c0 = arith.constant 0 : index
    %c0_0 = arith.constant 0 : index
    %0 = vector.load %arg2[%c0, %c0_0] : memref<16x32xf32, #tpu.memory_space<vmem>>, vector<16x32xf32>
    %c0_1 = arith.constant 0 : index
    %c0_2 = arith.constant 0 : index
    %1 = vector.load %arg3[%c0_1, %c0_2] : memref<32x64xf32, #tpu.memory_space<vmem>>, vector<32x64xf32>
    %cst = arith.constant dense<0.000000e+00> : vector<16x64xf32>
    %2 = tpu.matmul %0, %1, %cst {dimension_numbers = #tpu.dot_dimension_numbers<[1], [0], [0], [1], [0, 0, 1, 1], [], []>} : vector<16x32xf32>, vector<32x64xf32>, vector<16x64xf32> -> vector<16x64xf32>
    %c0_3 = arith.constant 0 : index
    %c0_4 = arith.constant 0 : index
    %3 = vector.load %arg4[%c0_3, %c0_4] : memref<1x64xf32, #tpu.memory_space<vmem>>, vector<1x64xf32>
    %4 = vector.broadcast %3 : vector<1x64xf32> to vector<16x64xf32>
    %5 = arith.addf %2, %4 : vector<16x64xf32>
    %cst_5 = arith.constant 0.000000e+00 : f32
    %6 = vector.broadcast %cst_5 : f32 to vector<16x64xf32>
    %7 = arith.maximumf %5, %6 : vector<16x64xf32>
    %c0_6 = arith.constant 0 : index
    %c0_7 = arith.constant 0 : index
    %8 = vector.load %arg5[%c0_6, %c0_7] : memref<64x32xf32, #tpu.memory_space<vmem>>, vector<64x32xf32>
    %cst_8 = arith.constant dense<0.000000e+00> : vector<16x32xf32>
    %9 = tpu.matmul %7, %8, %cst_8 {dimension_numbers = #tpu.dot_dimension_numbers<[1], [0], [0], [1], [0, 0, 1, 1], [], []>} : vector<16x64xf32>, vector<64x32xf32>, vector<16x32xf32> -> vector<16x32xf32>
    %c0_i32 = arith.constant 0 : i32
    %10 = arith.cmpi eq, %arg1, %c0_i32 : i32
    %11 = arith.extui %10 : i1 to i32
    %c0_i32_9 = arith.constant 0 : i32
    %12 = arith.cmpi ne, %11, %c0_i32_9 : i32
    scf.if %12 {
      %c0_14 = arith.constant 0 : index
      %c0_15 = arith.constant 0 : index
      %19 = vector.load %arg8[%c0_14, %c0_15] : memref<16x32xf32, #tpu.memory_space<vmem>>, vector<16x32xf32>
      tpu.vector_store %arg8[%c0_14, %c0_15], %9 {strides = array<i32>} : memref<16x32xf32, #tpu.memory_space<vmem>>, vector<16x32xf32>,
    } else {
    }
    %c0_i32_10 = arith.constant 0 : i32
    %13 = arith.cmpi ne, %arg1, %c0_i32_10 : i32
    %14 = arith.extui %13 : i1 to i32
    %c0_i32_11 = arith.constant 0 : i32
    %15 = arith.cmpi ne, %14, %c0_i32_11 : i32
    scf.if %15 {
      %c0_14 = arith.constant 0 : index
      %c0_15 = arith.constant 0 : index
      %19 = vector.load %arg8[%c0_14, %c0_15] : memref<16x32xf32, #tpu.memory_space<vmem>>, vector<16x32xf32>
      %20 = arith.addf %19, %9 : vector<16x32xf32>
      %c0_16 = arith.constant 0 : index
      %c0_17 = arith.constant 0 : index
      %21 = vector.load %arg8[%c0_16, %c0_17] : memref<16x32xf32, #tpu.memory_space<vmem>>, vector<16x32xf32>
      tpu.vector_store %arg8[%c0_16, %c0_17], %20 {strides = array<i32>} : memref<16x32xf32, #tpu.memory_space<vmem>>, vector<16x32xf32>,
    } else {
    }
    %c0_i32_12 = arith.constant 0 : i32
    %16 = arith.cmpi eq, %arg1, %c0_i32_12 : i32
    %17 = arith.extui %16 : i1 to i32
    %c0_i32_13 = arith.constant 0 : i32
    %18 = arith.cmpi ne, %17, %c0_i32_13 : i32
    scf.if %18 {
      %c0_14 = arith.constant 0 : index
      %c0_15 = arith.constant 0 : index
      %19 = vector.load %arg8[%c0_14, %c0_15] : memref<16x32xf32, #tpu.memory_space<vmem>>, vector<16x32xf32>
      %c0_16 = arith.constant 0 : index
      %c0_17 = arith.constant 0 : index
      %20 = vector.load %arg6[%c0_16, %c0_17] : memref<1x32xf32, #tpu.memory_space<vmem>>, vector<1x32xf32>
      %21 = vector.broadcast %20 : vector<1x32xf32> to vector<16x32xf32>
      %22 = arith.addf %19, %21 : vector<16x32xf32>
      %c0_18 = arith.constant 0 : index
      %c0_19 = arith.constant 0 : index
      %23 = vector.load %arg7[%c0_18, %c0_19] : memref<16x32xf32, #tpu.memory_space<vmem>>, vector<16x32xf32>
      tpu.vector_store %arg7[%c0_18, %c0_19], %22 {strides = array<i32>} : memref<16x32xf32, #tpu.memory_space<vmem>>, vector<16x32xf32>,
    } else {
    }
    return
  }
  func.func @transform_0(%arg0: i32, %arg1: i32) -> (i32, i32) {
    %c0_i32 = arith.constant 0 : i32
    %c0_i32_0 = arith.constant 0 : i32
    return %arg0, %c0_i32 : i32, i32
  }
  func.func @transform_1(%arg0: i32, %arg1: i32) -> (i32, i32) {
    %c0_i32 = arith.constant 0 : i32
    %c0_i32_0 = arith.constant 0 : i32
    return %c0_i32, %arg1 : i32, i32
  }
  func.func @transform_2(%arg0: i32, %arg1: i32) -> (i32, i32) {
    %c0_i32 = arith.constant 0 : i32
    %c0_i32_0 = arith.constant 0 : i32
    return %c0_i32, %arg1 : i32, i32
  }
  func.func @transform_3(%arg0: i32, %arg1: i32) -> (i32, i32) {
    %c0_i32 = arith.constant 0 : i32
    %c0_i32_0 = arith.constant 0 : i32
    return %arg1, %c0_i32 : i32, i32
  }
  func.func @transform_4(%arg0: i32, %arg1: i32) -> (i32, i32) {
    %c0_i32 = arith.constant 0 : i32
    %c0_i32_0 = arith.constant 0 : i32
    %c0_i32_1 = arith.constant 0 : i32
    return %c0_i32, %c0_i32_0 : i32, i32
  }
  func.func @transform_5(%arg0: i32, %arg1: i32) -> (i32, i32) {
    %c0_i32 = arith.constant 0 : i32
    %c0_i32_0 = arith.constant 0 : i32
    return %arg0, %c0_i32 : i32, i32
  }
}

</mosaic_0001>

<llo_original>
// kernel: tpu_custom_call.1
$region0: #{tpu_custom_call.1}
  #allocation0 [shape = 'u32[]', space=smem, size = 0x4, offset = 0x4, fixed_abs, tag = 'smem constant byte address 0x4 - core index']
  #allocation1 [shape = 'u32[144,128]{1,0:T(1,128)}', space=vmem, size = 0x12000, scoped, tag = 'internal scratch']
  #allocation2 [shape = 'f32[16,32]{1,0:T(8,128)}', space=vmem, size = 0x2000, scoped, tag = 'scratch operand']
  %s0 = inlined_call_operand.vmem [shape: f32[16,32], index: 0, kind: input, shape index: {}]
  %s1 = inlined_call_operand.vmem [shape: f32[32,64], index: 1, kind: input, shape index: {}]
  %s2 = inlined_call_operand.vmem [shape: f32[1,64], index: 2, kind: input, shape index: {}]
  %s3 = inlined_call_operand.vmem [shape: f32[64,32], index: 3, kind: input, shape index: {}]
  %s4 = inlined_call_operand.vmem [shape: f32[1,32], index: 4, kind: input, shape index: {}]
  %s5 = inlined_call_operand.hbm [shape: f32[16,32], index: 5, kind: output, shape index: {}]
  %s6 = sld [smem:[#allocation0]]
  $region42: #{tpu_custom_call.1} parent=0
    _
  %s8 = ssub.s32 1, %s6
  %s9 = scalar_select 0, %s8, %s6
  $region1: #{tpu_custom_call.1} parent=0
    #allocation3 [shape = 'u8[8192]{0}', space=vmem, size = 0x2000, scoped, tag = 'output window, operand 0, single buffered']
    #allocation4 [shape = 's32[1]{0}', space=sflag, size = 0x4, scoped, tag = 'scoped memory for tpu_custom_call.1']
    %10 = vsyncpa [#allocation4], 0
    // Predicated region
    $region2: #{tpu_custom_call.1} parent=1 // pred_check
      _
    $region3: #{tpu_custom_call.1} parent=1 // pred_check_branch
      %12 = sbr.rel (0) target = $region5
    $region4: #{tpu_custom_call.1} parent=1 // pred_region
      _
    $region5: #{tpu_custom_call.1} parent=1 // pred_fallthru
      _
    // Predicated region
    $region6: #{tpu_custom_call.1} parent=1 // pred_check
      _
    $region7: #{tpu_custom_call.1} parent=1 // pred_check_branch
      %14 = sbr.rel (0) target = $region9
    $region8: #{tpu_custom_call.1} parent=1 // pred_region
      _
    $region9: #{tpu_custom_call.1} parent=1 // pred_fallthru
      _
    // Predicated region
    $region10: #{tpu_custom_call.1} parent=1 // pred_check
      _
    $region11: #{tpu_custom_call.1} parent=1 // pred_check_branch
      %16 = sbr.rel (0) target = $region13
    $region12: #{tpu_custom_call.1} parent=1 // pred_region
      _
    $region13: #{tpu_custom_call.1} parent=1 // pred_fallthru
      _
    // Predicated region
    $region14: #{tpu_custom_call.1} parent=1 // pred_check
      _
    $region15: #{tpu_custom_call.1} parent=1 // pred_check_branch
      %18 = sbr.rel (0) target = $region17
    $region16: #{tpu_custom_call.1} parent=1 // pred_region
      _
    $region17: #{tpu_custom_call.1} parent=1 // pred_fallthru
      _
    // Predicated region
    $region18: #{tpu_custom_call.1} parent=1 // pred_check
      _
    $region19: #{tpu_custom_call.1} parent=1 // pred_check_branch
      %20 = sbr.rel (0) target = $region21
    $region20: #{tpu_custom_call.1} parent=1 // pred_region
      _
    $region21: #{tpu_custom_call.1} parent=1 // pred_fallthru
      _
    %v21 = vld [vmem:[%s0] sm:$0xff]
    %v22 = vld [vmem:[%s0 + $0x8] sm:$0xff]
    %v23 = vld [vmem:[%s1] sm:$0xff]
    %v24 = vld [vmem:[%s1 + $0x8] sm:$0xff]
    %v25 = vld [vmem:[%s1 + $0x10] sm:$0xff]
    %v26 = vld [vmem:[%s1 + $0x18] sm:$0xff]
    %v27 = vld [vmem:[%s2] sm:$0x1]
    %v29 = vlaneseq
    %v30 = vshrl.u32 %v29, 7
    %v31 = vsub.s32 0, %v30
    %v32 = vrot.slane %v27, %v31
    %vm34 = vcmask 261120
    %v36 = vsel %vm34, %v21, 0
    %v39 = vsel %vm34, %v22, 0
    %41 = vmatprep.subr.mxu0 0.0
    %42 = vmatpush1.msra.mxu0 0.0
    %43 = vmatprep.subr.mxu0 0.0
    %44 = vmatpush1.msra.mxu0 0.0
    %45 = vmatprep.subr.mxu0 0.0
    %46 = vmatpush1.msra.mxu0 0.0
    %47 = vmatprep.subr.mxu0 0.0
    %48 = vmatpush1.msra.mxu0 0.0
    %49 = vmatprep.subr.mxu0 0.0
    %50 = vmatpush1.msra.mxu0 0.0
    %51 = vmatprep.subr.mxu0 0.0
    %52 = vmatpush1.msra.mxu0 0.0
    %53 = vmatprep.subr.mxu0 0.0
    %54 = vmatpush1.msra.mxu0 0.0
    %55 = vmatprep.subr.mxu0 0.0
    %56 = vmatpush1.msra.mxu0 0.0
    %57 = vmatprep.subr.mxu0 0.0
    %58 = vmatpush1.msra.mxu0 0.0
    %59 = vmatprep.subr.mxu0 0.0
    %60 = vmatpush1.msra.mxu0 0.0
    %61 = vmatprep.subr.mxu0 0.0
    %62 = vmatpush1.msra.mxu0 0.0
    %63 = vmatprep.subr.mxu0 0.0
    %64 = vmatpush1.msra.mxu0 0.0
    %65 = vmatprep.subr.mxu0 0.0
    %66 = vmatpush1.msra.mxu0 %v26
    %67 = vmatprep.subr.mxu0 0.0
    %68 = vmatpush1.msra.mxu0 %v25
    %69 = vmatprep.subr.mxu0 0.0
    %70 = vmatpush1.msra.mxu0 %v24
    %71 = vmatprep.subr.mxu0 0.0
    %72 = vmatpush1.msra.mxu0 %v23
    %73 = vmatprep.subr.mxu0 0.0
    %74 = vmatpush2.msra.mxu0 0.0
    %75 = vmatprep.subr.mxu0 0.0
    %76 = vmatpush2.msra.mxu0 0.0
    %77 = vmatprep.subr.mxu0 0.0
    %78 = vmatpush2.msra.mxu0 0.0
    %79 = vmatprep.subr.mxu0 0.0
    %80 = vmatpush2.msra.mxu0 0.0
    %81 = vmatprep.subr.mxu0 0.0
    %82 = vmatpush2.msra.mxu0 0.0
    %83 = vmatprep.subr.mxu0 0.0
    %84 = vmatpush2.msra.mxu0 0.0
    %85 = vmatprep.subr.mxu0 0.0
    %86 = vmatpush2.msra.mxu0 0.0
    %87 = vmatprep.subr.mxu0 0.0
    %88 = vmatpush2.msra.mxu0 0.0
    %89 = vmatprep.subr.mxu0 0.0
    %90 = vmatpush2.msra.mxu0 0.0
    %91 = vmatprep.subr.mxu0 0.0
    %92 = vmatpush2.msra.mxu0 0.0
    %93 = vmatprep.subr.mxu0 0.0
    %94 = vmatpush2.msra.mxu0 0.0
    %95 = vmatprep.subr.mxu0 0.0
    %96 = vmatpush2.msra.mxu0 0.0
    %97 = vmatprep.subr.mxu0 0.0
    %98 = vmatpush2.msra.mxu0 0.0
    %99 = vmatprep.subr.mxu0 0.0
    %100 = vmatpush2.msra.mxu0 0.0
    %101 = vmatprep.subr.mxu0 0.0
    %102 = vmatpush2.msra.mxu0 0.0
    %103 = vmatprep.subr.mxu0 0.0
    %104 = vmatpush2.msra.mxu0 0.0
    %105 = vmatprep.mubr.f32.mxu0 0.0
    %106 = vmatmul.mubr.f32.gmra.mxu0 %v36
    %v107 = vpop.f32.mrf.mxu0
    %v108 = vadd.f32 %v32, %v107
    %v109 = vpop.f32.mrf.mxu0
    %110 = vmatprep.mubr.f32.mxu0 0.0
    %111 = vmatmul.mubr.f32.gmra.mxu0 %v39
    %v112 = vpop.f32.mrf.mxu0
    %v113 = vadd.f32 %v32, %v112
    %v114 = vpop.f32.mrf.mxu0
    %115 = vdwg.mxu0
    %v116 = vmax.f32 %v108, 0.0
    %v117 = vmax.f32 %v113, 0.0
    %v118 = vld [vmem:[%s3] sm:$0xff]
    %v119 = vld [vmem:[%s3 + $0x8] sm:$0xff]
    %v120 = vld [vmem:[%s3 + $0x10] sm:$0xff]
    %v121 = vld [vmem:[%s3 + $0x18] sm:$0xff]
    %v122 = vld [vmem:[%s3 + $0x20] sm:$0xff]
    %v123 = vld [vmem:[%s3 + $0x28] sm:$0xff]
    %v124 = vld [vmem:[%s3 + $0x30] sm:$0xff]
    %v125 = vld [vmem:[%s3 + $0x38] sm:$0xff]
    %vm126 = vcmask 523264
    %v128 = vsel %vm126, %v116, 0
    %v131 = vsel %vm126, %v117, 0
    %133 = vmatprep.subr.mxu0 0.0
    %134 = vmatpush1.msra.mxu0 0.0
    %135 = vmatprep.subr.mxu0 0.0
    %136 = vmatpush1.msra.mxu0 0.0
    %137 = vmatprep.subr.mxu0 0.0
    %138 = vmatpush1.msra.mxu0 0.0
    %139 = vmatprep.subr.mxu0 0.0
    %140 = vmatpush1.msra.mxu0 0.0
    %141 = vmatprep.subr.mxu0 0.0
    %142 = vmatpush1.msra.mxu0 0.0
    %143 = vmatprep.subr.mxu0 0.0
    %144 = vmatpush1.msra.mxu0 0.0
    %145 = vmatprep.subr.mxu0 0.0
    %146 = vmatpush1.msra.mxu0 0.0
    %147 = vmatprep.subr.mxu0 0.0
    %148 = vmatpush1.msra.mxu0 0.0
    %149 = vmatprep.subr.mxu0 0.0
    %150 = vmatpush1.msra.mxu0 %v125
    %151 = vmatprep.subr.mxu0 0.0
    %152 = vmatpush1.msra.mxu0 %v124
    %153 = vmatprep.subr.mxu0 0.0
    %154 = vmatpush1.msra.mxu0 %v123
    %155 = vmatprep.subr.mxu0 0.0
    %156 = vmatpush1.msra.mxu0 %v122
    %157 = vmatprep.subr.mxu0 0.0
    %158 = vmatpush1.msra.mxu0 %v121
    %159 = vmatprep.subr.mxu0 0.0
    %160 = vmatpush1.msra.mxu0 %v120
    %161 = vmatprep.subr.mxu0 0.0
    %162 = vmatpush1.msra.mxu0 %v119
    %163 = vmatprep.subr.mxu0 0.0
    %164 = vmatpush1.msra.mxu0 %v118
    %165 = vmatprep.subr.mxu0 0.0
    %166 = vmatpush2.msra.mxu0 0.0
    %167 = vmatprep.subr.mxu0 0.0
    %168 = vmatpush2.msra.mxu0 0.0
    %169 = vmatprep.subr.mxu0 0.0
    %170 = vmatpush2.msra.mxu0 0.0
    %171 = vmatprep.subr.mxu0 0.0
    %172 = vmatpush2.msra.mxu0 0.0
    %173 = vmatprep.subr.mxu0 0.0
    %174 = vmatpush2.msra.mxu0 0.0
    %175 = vmatprep.subr.mxu0 0.0
    %176 = vmatpush2.msra.mxu0 0.0
    %177 = vmatprep.subr.mxu0 0.0
    %178 = vmatpush2.msra.mxu0 0.0
    %179 = vmatprep.subr.mxu0 0.0
    %180 = vmatpush2.msra.mxu0 0.0
    %181 = vmatprep.subr.mxu0 0.0
    %182 = vmatpush2.msra.mxu0 0.0
    %183 = vmatprep.subr.mxu0 0.0
    %184 = vmatpush2.msra.mxu0 0.0
    %185 = vmatprep.subr.mxu0 0.0
    %186 = vmatpush2.msra.mxu0 0.0
    %187 = vmatprep.subr.mxu0 0.0
    %188 = vmatpush2.msra.mxu0 0.0
    %189 = vmatprep.subr.mxu0 0.0
    %190 = vmatpush2.msra.mxu0 0.0
    %191 = vmatprep.subr.mxu0 0.0
    %192 = vmatpush2.msra.mxu0 0.0
    %193 = vmatprep.subr.mxu0 0.0
    %194 = vmatpush2.msra.mxu0 0.0
    %195 = vmatprep.subr.mxu0 0.0
    %196 = vmatpush2.msra.mxu0 0.0
    %197 = vmatprep.mubr.f32.mxu0 0.0
    %198 = vmatmul.mubr.f32.gmra.mxu0 %v128
    %v199 = vpop.f32.mrf.mxu0
    %v200 = vadd.f32 0.0, %v199
    %v201 = vpop.f32.mrf.mxu0
    %202 = vmatprep.mubr.f32.mxu0 0.0
    %203 = vmatmul.mubr.f32.gmra.mxu0 %v131
    %v204 = vpop.f32.mrf.mxu0
    %v205 = vadd.f32 0.0, %v204
    %v206 = vpop.f32.mrf.mxu0
    %207 = vdwg.mxu0
    %p208 = scmp.eq.s32.totalorder 0, 0
    // Predicated region
    $region22: #{tpu_custom_call.1} parent=1 // pred_check
      %p209 = pneg %p208
    $region23: #{tpu_custom_call.1} parent=1 // pred_check_branch
      %211 = sbr.rel (%p209) target = $region25
    $region24: #{tpu_custom_call.1} parent=1 // pred_region
      %212 = vst.msk [vmem:[#allocation2] sm:$0xff] %vm34, %v200
      %213 = vst.msk [vmem:[#allocation2 + $0x8] sm:$0xff] %vm34, %v205
    $region25: #{tpu_custom_call.1} parent=1 // pred_fallthru
      _
    %p214 = scmp.ne.s32.totalorder 0, 0
    // Predicated region
    $region26: #{tpu_custom_call.1} parent=1 // pred_check
      %p215 = pneg %p214
    $region27: #{tpu_custom_call.1} parent=1 // pred_check_branch
      %217 = sbr.rel (%p215) target = $region29
    $region28: #{tpu_custom_call.1} parent=1 // pred_region
      %v218 = vld [vmem:[#allocation2] sm:$0xff]
      %v219 = vld [vmem:[#allocation2 + $0x8] sm:$0xff]
      %v220 = vadd.f32 %v218, %v200
      %v221 = vadd.f32 %v219, %v205
      %222 = vst.msk [vmem:[#allocation2] sm:$0xff] %vm34, %v220
      %223 = vst.msk [vmem:[#allocation2 + $0x8] sm:$0xff] %vm34, %v221
    $region29: #{tpu_custom_call.1} parent=1 // pred_fallthru
      _
    // Predicated region
    $region30: #{tpu_custom_call.1} parent=1 // pred_check
      %p224 = pneg %p208
    $region31: #{tpu_custom_call.1} parent=1 // pred_check_branch
      %226 = sbr.rel (%p224) target = $region33
    $region32: #{tpu_custom_call.1} parent=1 // pred_region
      %v227 = vld [vmem:[#allocation2] sm:$0xff]
      %v228 = vld [vmem:[#allocation2 + $0x8] sm:$0xff]
      %v229 = vld [vmem:[%s4] sm:$0x1]
      %v231 = vlaneseq
      %v232 = vshrl.u32 %v231, 7
      %v233 = vsub.s32 0, %v232
      %v234 = vrot.slane %v229, %v233
      %v236 = vadd.f32 %v227, %v234
      %v237 = vadd.f32 %v228, %v234
      %238 = vst.msk [vmem:[#allocation3] sm:$0xff] %vm34, %v236
      %239 = vst.msk [vmem:[#allocation3 + $0x8] sm:$0xff] %vm34, %v237
    $region33: #{tpu_custom_call.1} parent=1 // pred_fallthru
      _
    // Predicated region
    $region34: #{tpu_custom_call.1} parent=1 // pred_check
      _
    $region35: #{tpu_custom_call.1} parent=1 // pred_check_branch
      %241 = sbr.rel (0) target = $region37
    $region36: #{tpu_custom_call.1} parent=1 // pred_region
      %s243 = ssub.s32 256, 256
      %244 = vsyncadd [#allocation4], %s243
      %s245 = sshll.u32 [#allocation3], 4
      %s246 = int_to_ptr.vmem [resolvable:$true] %s245
      %251 = dma.vmem_to_hbm [thread:$0]  %s246, 256, %s5, [#allocation4], 128, 128, 8
    $region37: #{tpu_custom_call.1} parent=1 // pred_fallthru
      _
    // Predicated region
    $region38: #{tpu_custom_call.1} parent=1 // pred_check
      _
    $region39: #{tpu_custom_call.1} parent=1 // pred_check_branch
      %253 = sbr.rel (0) target = $region41
    $region40: #{tpu_custom_call.1} parent=1 // pred_region
      %254 = dma.done [#allocation4], 256
    $region41: #{tpu_custom_call.1} parent=1 // pred_fallthru
      _
    %255 = vsyncpa [#allocation4], 1

</llo_original>
